<compile_context>
chip_gen: v7x
topology: tpu7x:2x2x1
jax: 0.10.0
libtpu: 0.0.40
codegen_flags: <defaults>
</compile_context>

<pallas_src>
import functools

import jax
import jax.numpy as jnp
from jax.experimental import pallas as pl
from jax.experimental.pallas import tpu as pltpu


def _fused_conv_bn_relu_kernel(x_ref, w_ref, gamma_ref, beta_ref, o_ref,
                               sumy_ref, sumy2_ref, scale_ref, bias_ref,
                               *, count, eps):
    """Fused 1x1x1 conv + BatchNorm (training-mode batch stats) + ReLU.

    Grid = (phase, n, spatial_tile), all sequential:
      phase 0: y = W @ x; accumulate per-output-channel sum(y), sum(y*y)
      phase 1 (first step): fold stats into scale/bias
      phase 1: relu((W @ x) * scale + bias), store.
    """
    p = pl.program_id(0)
    first_tile = jnp.logical_and(pl.program_id(1) == 0, pl.program_id(2) == 0)

    @pl.when(jnp.logical_and(p == 0, first_tile))
    def _init():
        sumy_ref[...] = jnp.zeros_like(sumy_ref)
        sumy2_ref[...] = jnp.zeros_like(sumy2_ref)

    @pl.when(p == 0)
    def _stats():
        x2d = x_ref[0].astype(jnp.float32)                    # (Cin, tile_s)
        y = jnp.dot(w_ref[...], x2d,
                    preferred_element_type=jnp.float32)       # (Cout, tile_s)
        sumy_ref[...] += jnp.sum(y, axis=1, keepdims=True)    # (Cout, 1)
        sumy2_ref[...] += jnp.sum(y * y, axis=1, keepdims=True)

    @pl.when(jnp.logical_and(p == 1, first_tile))
    def _finalize():
        inv = 1.0 / count
        mean = sumy_ref[...] * inv                            # (Cout, 1)
        var = jnp.maximum(sumy2_ref[...] * inv - mean * mean, 0.0)
        scale = gamma_ref[...] * jax.lax.rsqrt(var + eps)
        scale_ref[...] = scale
        bias_ref[...] = beta_ref[...] - mean * scale

    @pl.when(p == 1)
    def _normalize_store():
        x2d = x_ref[0].astype(jnp.float32)
        y = jnp.dot(w_ref[...], x2d, preferred_element_type=jnp.float32)
        out = y * scale_ref[...] + bias_ref[...]
        o_ref[0] = jnp.maximum(out, 0.0).astype(o_ref.dtype)


def _pick_tile_s(S, Cin, Cout, budget_bytes=24 << 20):
    """Largest lane-dense tile that divides S and fits a VMEM budget."""
    if S % 128 == 0:
        for cand in (2048, 1024, 512, 256, 128):
            if S % cand != 0:
                continue
            # double-buffered f32 x + out tiles (upper bound)
            per_tile = 4 * 2 * (Cin + Cout) * cand
            if per_tile <= budget_bytes:
                return cand
    return S  # full spatial extent as a single block (always legal)


def basic_conv3d(x, weight, gamma, beta, *, eps=1e-3, tile_s=None):
    """x: (N, Cin, D, H, W); weight: (Cout, Cin, 1, 1, 1); gamma/beta: (Cout,)."""
    N, Cin, D, H, W = x.shape
    Cout = weight.shape[0]
    assert weight.shape == (Cout, Cin, 1, 1, 1), (
        "only the default 1x1x1 pointwise conv is implemented")

    S = D * H * W
    if tile_s is None:
        tile_s = _pick_tile_s(S, Cin, Cout)
    assert S % tile_s == 0, "tile_s must divide D*H*W"
    num_tiles = S // tile_s

    # Free reshapes (no data movement): NCDHW -> (N, Cin, S); out -> (N, Cout, S).
    x3 = x.reshape(N, Cin, S)
    w2d = weight.reshape(Cout, Cin).astype(jnp.float32)
    gamma2 = gamma.reshape(Cout, 1).astype(jnp.float32)
    beta2 = beta.reshape(Cout, 1).astype(jnp.float32)

    count = float(N * S)
    grid = (2, N, num_tiles)

    # Output blocks only materialize during phase 1; during phase 0 the output
    # block index stays pinned at (0,0,0) so nothing stale is written back
    # (phase 1's first step writes that same block before any writeback).
    out_index_map = lambda p, n, t: (n * p, 0, t * p)

    # VMEM budget (double-buffered x / out tiles + resident weight + stats).
    needed = 4 * (2 * Cin * tile_s + 2 * Cout * tile_s
                  + Cout * Cin + 8 * 6 * Cout) + (1 << 20)
    cp_kwargs = dict(
        dimension_semantics=("arbitrary", "arbitrary", "arbitrary"))
    if needed > (32 << 20):
        # Keep under v7x's smaller VMEM; real use should shrink tile_s instead.
        cp_kwargs["vmem_limit_bytes"] = int(min(needed, 56 << 20))

    out3 = pl.pallas_call(
        functools.partial(_fused_conv_bn_relu_kernel, count=count, eps=eps),
        out_shape=jax.ShapeDtypeStruct((N, Cout, S), x.dtype),
        grid_spec=pltpu.PrefetchScalarGridSpec(
            num_scalar_prefetch=0,
            grid=grid,
            in_specs=[
                pl.BlockSpec((1, Cin, tile_s), lambda p, n, t: (n, 0, t)),
                pl.BlockSpec((Cout, Cin), lambda p, n, t: (0, 0)),
                pl.BlockSpec((Cout, 1), lambda p, n, t: (0, 0)),
                pl.BlockSpec((Cout, 1), lambda p, n, t: (0, 0)),
            ],
            out_specs=pl.BlockSpec((1, Cout, tile_s), out_index_map),
            scratch_shapes=[
                pltpu.VMEM((Cout, 1), jnp.float32),   # sum(y)
                pltpu.VMEM((Cout, 1), jnp.float32),   # sum(y*y)
                pltpu.VMEM((Cout, 1), jnp.float32),   # gamma * rsqrt(var+eps)
                pltpu.VMEM((Cout, 1), jnp.float32),   # beta - mean * scale
            ],
        ),
        compiler_params=pltpu.CompilerParams(**cp_kwargs),
    )(x3, w2d, gamma2, beta2)

    return out3.reshape(N, Cout, D, H, W)


def _reference(x, weight, gamma, beta, eps=1e-3):
    """Pure-JAX reference matching the PyTorch training-mode forward."""
    y = jax.lax.conv_general_dilated(
        x, weight, window_strides=(1, 1, 1), padding="VALID",
        dimension_numbers=("NCDHW", "OIDHW", "NCDHW"))
    mean = jnp.mean(y, axis=(0, 2, 3, 4), keepdims=True)
    var = jnp.mean((y - mean) ** 2, axis=(0, 2, 3, 4), keepdims=True)
    yn = (y - mean) * jax.lax.rsqrt(var + eps)
    yn = yn * gamma.reshape(1, -1, 1, 1, 1) + beta.reshape(1, -1, 1, 1, 1)
    return jnp.maximum(yn, 0.0)


if __name__ == "__main__":
    key = jax.random.PRNGKey(0)
    k_x, k_w, k_g, k_b = jax.random.split(key, 4)

    N, Cin, Cout, D, H, W = 2, 4, 8, 4, 16, 16        # S = D*H*W = 1024

    x = jax.random.normal(k_x, (N, Cin, D, H, W), dtype=jnp.float32)
    weight = 0.1 * jax.random.normal(k_w, (Cout, Cin, 1, 1, 1),
                                     dtype=jnp.float32)
    gamma = jax.random.uniform(k_g, (Cout,), minval=0.5, maxval=1.5,
                               dtype=jnp.float32)
    beta = 0.1 * jax.random.normal(k_b, (Cout,), dtype=jnp.float32)

    # tile_s=256 -> 4 spatial tiles per batch element (exercises accumulation
    # across the grid and the phase-gated output index map).
    out = basic_conv3d(x, weight, gamma, beta, eps=1e-3, tile_s=256)
    out = jax.block_until_ready(out)

    ref = _reference(x, weight, gamma, beta, eps=1e-3)
    assert out.shape == (N, Cout, D, H, W)
    assert jnp.allclose(out, ref, rtol=2e-3, atol=2e-3), "mismatch vs reference"

    print("KERNEL_OK")
</pallas_src>

<mosaic_0001>
module attributes {stable_mosaic.version = 11 : i64} {
  func.func @_fused_conv_bn_relu_kernel(%arg0: i32, %arg1: i32, %arg2: i32, %arg3: memref<1x4x256xf32, #tpu.memory_space<vmem>>, %arg4: memref<8x4xf32, #tpu.memory_space<vmem>>, %arg5: memref<8x1xf32, #tpu.memory_space<vmem>>, %arg6: memref<8x1xf32, #tpu.memory_space<vmem>>, %arg7: memref<1x8x256xf32, #tpu.memory_space<vmem>>, %arg8: memref<8x1xf32, #tpu.memory_space<vmem>>, %arg9: memref<8x1xf32, #tpu.memory_space<vmem>>, %arg10: memref<8x1xf32, #tpu.memory_space<vmem>>, %arg11: memref<8x1xf32, #tpu.memory_space<vmem>>) attributes {dimension_semantics = [#tpu.dimension_semantics<arbitrary>, #tpu.dimension_semantics<arbitrary>, #tpu.dimension_semantics<arbitrary>], iteration_bounds = array<i64: 2, 2, 4>, scalar_prefetch = 0 : i64, scratch_operands = 4 : i64, tpu.core_type = #tpu.core_type<tc>, window_params = [{transform_indices = @transform_0, window_bounds = array<i64: 1, 4, 256>}, {pipeline_mode = #tpu.pipeline_mode<synchronous>, transform_indices = @transform_1, window_bounds = array<i64: 8, 4>}, {pipeline_mode = #tpu.pipeline_mode<synchronous>, transform_indices = @transform_2, window_bounds = array<i64: 8, 1>}, {pipeline_mode = #tpu.pipeline_mode<synchronous>, transform_indices = @transform_3, window_bounds = array<i64: 8, 1>}, {transform_indices = @transform_4, window_bounds = array<i64: 1, 8, 256>}]} {
    %c0_i32 = arith.constant 0 : i32
    %0 = arith.cmpi eq, %arg1, %c0_i32 : i32
    %c0_i32_0 = arith.constant 0 : i32
    %1 = arith.cmpi eq, %arg2, %c0_i32_0 : i32
    %2 = arith.andi %0, %1 : i1
    %c0_i32_1 = arith.constant 0 : i32
    %3 = arith.cmpi eq, %arg0, %c0_i32_1 : i32
    %4 = arith.andi %3, %2 : i1
    %5 = arith.extui %4 : i1 to i32
    %c0_i32_2 = arith.constant 0 : i32
    %6 = arith.cmpi ne, %5, %c0_i32_2 : i32
    scf.if %6 {
      %cst = arith.constant 0.000000e+00 : f32
      %17 = vector.broadcast %cst : f32 to vector<8x1xf32>
      %c0 = arith.constant 0 : index
      %c0_8 = arith.constant 0 : index
      %18 = vector.load %arg8[%c0, %c0_8] : memref<8x1xf32, #tpu.memory_space<vmem>>, vector<8x1xf32>
      tpu.vector_store %arg8[%c0, %c0_8], %17 {strides = array<i32>} : memref<8x1xf32, #tpu.memory_space<vmem>>, vector<8x1xf32>,
      %cst_9 = arith.constant 0.000000e+00 : f32
      %19 = vector.broadcast %cst_9 : f32 to vector<8x1xf32>
      %c0_10 = arith.constant 0 : index
      %c0_11 = arith.constant 0 : index
      %20 = vector.load %arg9[%c0_10, %c0_11] : memref<8x1xf32, #tpu.memory_space<vmem>>, vector<8x1xf32>
      tpu.vector_store %arg9[%c0_10, %c0_11], %19 {strides = array<i32>} : memref<8x1xf32, #tpu.memory_space<vmem>>, vector<8x1xf32>,
    } else {
    }
    %c0_i32_3 = arith.constant 0 : i32
    %7 = arith.cmpi eq, %arg0, %c0_i32_3 : i32
    %8 = arith.extui %7 : i1 to i32
    %c0_i32_4 = arith.constant 0 : i32
    %9 = arith.cmpi ne, %8, %c0_i32_4 : i32
    scf.if %9 {
      %c0 = arith.constant 0 : index
      %c0_8 = arith.constant 0 : index
      %c0_9 = arith.constant 0 : index
      %17 = vector.load %arg3[%c0, %c0_8, %c0_9] : memref<1x4x256xf32, #tpu.memory_space<vmem>>, vector<1x4x256xf32>
      %18 = vector.shape_cast %17 : vector<1x4x256xf32> to vector<4x256xf32>
      %c0_10 = arith.constant 0 : index
      %c0_11 = arith.constant 0 : index
      %19 = vector.load %arg4[%c0_10, %c0_11] : memref<8x4xf32, #tpu.memory_space<vmem>>, vector<8x4xf32>
      %cst = arith.constant dense<0.000000e+00> : vector<8x256xf32>
      %20 = tpu.matmul %19, %18, %cst {dimension_numbers = #tpu.dot_dimension_numbers<[1], [0], [0], [1], [0, 0, 1, 1], [], []>} : vector<8x4xf32>, vector<4x256xf32>, vector<8x256xf32> -> vector<8x256xf32>
      %c0_12 = arith.constant 0 : index
      %c0_13 = arith.constant 0 : index
      %21 = vector.load %arg8[%c0_12, %c0_13] : memref<8x1xf32, #tpu.memory_space<vmem>>, vector<8x1xf32>
      %cst_14 = arith.constant dense<0.000000e+00> : vector<8xf32>
      %22 = vector.multi_reduction <add>, %20, %cst_14 [1] : vector<8x256xf32> to vector<8xf32>
      %23 = vector.shape_cast %22 : vector<8xf32> to vector<8x1xf32>
      %24 = arith.addf %21, %23 : vector<8x1xf32>
      %c0_15 = arith.constant 0 : index
      %c0_16 = arith.constant 0 : index
      %25 = vector.load %arg8[%c0_15, %c0_16] : memref<8x1xf32, #tpu.memory_space<vmem>>, vector<8x1xf32>
      tpu.vector_store %arg8[%c0_15, %c0_16], %24 {strides = array<i32>} : memref<8x1xf32, #tpu.memory_space<vmem>>, vector<8x1xf32>,
      %c0_17 = arith.constant 0 : index
      %c0_18 = arith.constant 0 : index
      %26 = vector.load %arg9[%c0_17, %c0_18] : memref<8x1xf32, #tpu.memory_space<vmem>>, vector<8x1xf32>
      %27 = arith.mulf %20, %20 : vector<8x256xf32>
      %cst_19 = arith.constant dense<0.000000e+00> : vector<8xf32>
      %28 = vector.multi_reduction <add>, %27, %cst_19 [1] : vector<8x256xf32> to vector<8xf32>
      %29 = vector.shape_cast %28 : vector<8xf32> to vector<8x1xf32>
      %30 = arith.addf %26, %29 : vector<8x1xf32>
      %c0_20 = arith.constant 0 : index
      %c0_21 = arith.constant 0 : index
      %31 = vector.load %arg9[%c0_20, %c0_21] : memref<8x1xf32, #tpu.memory_space<vmem>>, vector<8x1xf32>
      tpu.vector_store %arg9[%c0_20, %c0_21], %30 {strides = array<i32>} : memref<8x1xf32, #tpu.memory_space<vmem>>, vector<8x1xf32>,
    } else {
    }
    %c1_i32 = arith.constant 1 : i32
    %10 = arith.cmpi eq, %arg0, %c1_i32 : i32
    %11 = arith.andi %10, %2 : i1
    %12 = arith.extui %11 : i1 to i32
    %c0_i32_5 = arith.constant 0 : i32
    %13 = arith.cmpi ne, %12, %c0_i32_5 : i32
    scf.if %13 {
      %c0 = arith.constant 0 : index
      %c0_8 = arith.constant 0 : index
      %17 = vector.load %arg8[%c0, %c0_8] : memref<8x1xf32, #tpu.memory_space<vmem>>, vector<8x1xf32>
      %cst = arith.constant 4.8828125E-4 : f32
      %18 = vector.broadcast %cst : f32 to vector<8x1xf32>
      %19 = arith.mulf %17, %18 : vector<8x1xf32>
      %c0_9 = arith.constant 0 : index
      %c0_10 = arith.constant 0 : index
      %20 = vector.load %arg9[%c0_9, %c0_10] : memref<8x1xf32, #tpu.memory_space<vmem>>, vector<8x1xf32>
      %cst_11 = arith.constant 4.8828125E-4 : f32
      %21 = vector.broadcast %cst_11 : f32 to vector<8x1xf32>
      %22 = arith.mulf %20, %21 : vector<8x1xf32>
      %23 = arith.mulf %19, %19 : vector<8x1xf32>
      %24 = arith.subf %22, %23 : vector<8x1xf32>
      %cst_12 = arith.constant 0.000000e+00 : f32
      %25 = vector.broadcast %cst_12 : f32 to vector<8x1xf32>
      %26 = arith.maximumf %24, %25 : vector<8x1xf32>
      %c0_13 = arith.constant 0 : index
      %c0_14 = arith.constant 0 : index
      %27 = vector.load %arg5[%c0_13, %c0_14] : memref<8x1xf32, #tpu.memory_space<vmem>>, vector<8x1xf32>
      %cst_15 = arith.constant 1.000000e-03 : f32
      %28 = vector.broadcast %cst_15 : f32 to vector<8x1xf32>
      %29 = arith.addf %26, %28 : vector<8x1xf32>
      %30 = math.rsqrt %29 : vector<8x1xf32>
      %31 = arith.mulf %27, %30 : vector<8x1xf32>
      %c0_16 = arith.constant 0 : index
      %c0_17 = arith.constant 0 : index
      %32 = vector.load %arg10[%c0_16, %c0_17] : memref<8x1xf32, #tpu.memory_space<vmem>>, vector<8x1xf32>
      tpu.vector_store %arg10[%c0_16, %c0_17], %31 {strides = array<i32>} : memref<8x1xf32, #tpu.memory_space<vmem>>, vector<8x1xf32>,
      %c0_18 = arith.constant 0 : index
      %c0_19 = arith.constant 0 : index
      %33 = vector.load %arg6[%c0_18, %c0_19] : memref<8x1xf32, #tpu.memory_space<vmem>>, vector<8x1xf32>
      %34 = arith.mulf %19, %31 : vector<8x1xf32>
      %35 = arith.subf %33, %34 : vector<8x1xf32>
      %c0_20 = arith.constant 0 : index
      %c0_21 = arith.constant 0 : index
      %36 = vector.load %arg11[%c0_20, %c0_21] : memref<8x1xf32, #tpu.memory_space<vmem>>, vector<8x1xf32>
      tpu.vector_store %arg11[%c0_20, %c0_21], %35 {strides = array<i32>} : memref<8x1xf32, #tpu.memory_space<vmem>>, vector<8x1xf32>,
    } else {
    }
    %c1_i32_6 = arith.constant 1 : i32
    %14 = arith.cmpi eq, %arg0, %c1_i32_6 : i32
    %15 = arith.extui %14 : i1 to i32
    %c0_i32_7 = arith.constant 0 : i32
    %16 = arith.cmpi ne, %15, %c0_i32_7 : i32
    scf.if %16 {
      %c0 = arith.constant 0 : index
      %c0_8 = arith.constant 0 : index
      %c0_9 = arith.constant 0 : index
      %17 = vector.load %arg3[%c0, %c0_8, %c0_9] : memref<1x4x256xf32, #tpu.memory_space<vmem>>, vector<1x4x256xf32>
      %18 = vector.shape_cast %17 : vector<1x4x256xf32> to vector<4x256xf32>
      %c0_10 = arith.constant 0 : index
      %c0_11 = arith.constant 0 : index
      %19 = vector.load %arg4[%c0_10, %c0_11] : memref<8x4xf32, #tpu.memory_space<vmem>>, vector<8x4xf32>
      %cst = arith.constant dense<0.000000e+00> : vector<8x256xf32>
      %20 = tpu.matmul %19, %18, %cst {dimension_numbers = #tpu.dot_dimension_numbers<[1], [0], [0], [1], [0, 0, 1, 1], [], []>} : vector<8x4xf32>, vector<4x256xf32>, vector<8x256xf32> -> vector<8x256xf32>
      %c0_12 = arith.constant 0 : index
      %c0_13 = arith.constant 0 : index
      %21 = vector.load %arg10[%c0_12, %c0_13] : memref<8x1xf32, #tpu.memory_space<vmem>>, vector<8x1xf32>
      %22 = vector.broadcast %21 : vector<8x1xf32> to vector<8x256xf32>
      %23 = arith.mulf %20, %22 : vector<8x256xf32>
      %c0_14 = arith.constant 0 : index
      %c0_15 = arith.constant 0 : index
      %24 = vector.load %arg11[%c0_14, %c0_15] : memref<8x1xf32, #tpu.memory_space<vmem>>, vector<8x1xf32>
      %25 = vector.broadcast %24 : vector<8x1xf32> to vector<8x256xf32>
      %26 = arith.addf %23, %25 : vector<8x256xf32>
      %cst_16 = arith.constant 0.000000e+00 : f32
      %27 = vector.broadcast %cst_16 : f32 to vector<8x256xf32>
      %28 = arith.maximumf %26, %27 : vector<8x256xf32>
      %c0_17 = arith.constant 0 : index
      %c0_18 = arith.constant 0 : index
      %c0_19 = arith.constant 0 : index
      %29 = vector.load %arg7[%c0_17, %c0_18, %c0_19] : memref<1x8x256xf32, #tpu.memory_space<vmem>>, vector<1x8x256xf32>
      %30 = vector.shape_cast %29 : vector<1x8x256xf32> to vector<8x256xf32>
      %31 = vector.shape_cast %28 : vector<8x256xf32> to vector<1x8x256xf32>
      tpu.vector_store %arg7[%c0_17, %c0_18, %c0_19], %31 {strides = array<i32>} : memref<1x8x256xf32, #tpu.memory_space<vmem>>, vector<1x8x256xf32>,
    } else {
    }
    return
  }
  func.func @transform_0(%arg0: i32, %arg1: i32, %arg2: i32) -> (i32, i32, i32) {
    %c0_i32 = arith.constant 0 : i32
    %c0_i32_0 = arith.constant 0 : i32
    return %arg1, %c0_i32, %arg2 : i32, i32, i32
  }
  func.func @transform_1(%arg0: i32, %arg1: i32, %arg2: i32) -> (i32, i32) {
    %c0_i32 = arith.constant 0 : i32
    %c0_i32_0 = arith.constant 0 : i32
    %c0_i32_1 = arith.constant 0 : i32
    return %c0_i32, %c0_i32_0 : i32, i32
  }
  func.func @transform_2(%arg0: i32, %arg1: i32, %arg2: i32) -> (i32, i32) {
    %c0_i32 = arith.constant 0 : i32
    %c0_i32_0 = arith.constant 0 : i32
    %c0_i32_1 = arith.constant 0 : i32
    return %c0_i32, %c0_i32_0 : i32, i32
  }
  func.func @transform_3(%arg0: i32, %arg1: i32, %arg2: i32) -> (i32, i32) {
    %c0_i32 = arith.constant 0 : i32
    %c0_i32_0 = arith.constant 0 : i32
    %c0_i32_1 = arith.constant 0 : i32
    return %c0_i32, %c0_i32_0 : i32, i32
  }
  func.func @transform_4(%arg0: i32, %arg1: i32, %arg2: i32) -> (i32, i32, i32) {
    %0 = arith.muli %arg1, %arg0 : i32
    %1 = arith.muli %arg2, %arg0 : i32
    %c0_i32 = arith.constant 0 : i32
    %c0_i32_0 = arith.constant 0 : i32
    return %0, %c0_i32, %1 : i32, i32, i32
  }
}

</mosaic_0001>

<llo_original>
// kernel: tpu_custom_call.1
$region0: #{tpu_custom_call.1}
  #allocation0 [shape = 'u32[]', space=smem, size = 0x4, offset = 0x4, fixed_abs, tag = 'smem constant byte address 0x4 - core index']
  #allocation1 [shape = 'u32[144,128]{1,0:T(1,128)}', space=vmem, size = 0x12000, scoped, tag = 'internal scratch']
  #allocation2 [shape = 'f32[8,1]{1,0:T(8,128)}', space=vmem, size = 0x1000, scoped, tag = 'scratch operand']
  #allocation3 [shape = 'f32[8,1]{1,0:T(8,128)}', space=vmem, size = 0x1000, scoped, tag = 'scratch operand']
  #allocation4 [shape = 'f32[8,1]{1,0:T(8,128)}', space=vmem, size = 0x1000, scoped, tag = 'scratch operand']
  #allocation5 [shape = 'f32[8,1]{1,0:T(8,128)}', space=vmem, size = 0x1000, scoped, tag = 'scratch operand']
  %s0 = inlined_call_operand.hbm [shape: f32[2,4,1024], index: 0, kind: input, shape index: {}]
  %s1 = inlined_call_operand.vmem [shape: f32[8,4], index: 1, kind: input, shape index: {}]
  %s2 = inlined_call_operand.vmem [shape: f32[8,1], index: 2, kind: input, shape index: {}]
  %s3 = inlined_call_operand.vmem [shape: f32[8,1], index: 3, kind: input, shape index: {}]
  %s4 = inlined_call_operand.hbm [shape: f32[2,8,1024], index: 4, kind: output, shape index: {}]
  %s5 = sld [smem:[#allocation0]]
  $region69: #{tpu_custom_call.1} parent=0
    _
  %s7 = ssub.s32 1, %s5
  %s8 = scalar_select 0, %s7, %s5
  $region1: #{tpu_custom_call.1} parent=0
    #allocation6 [shape = 'u8[8192]{0}', space=vmem, size = 0x2000, scoped, tag = 'input window, operand 0']
    #allocation7 [shape = 's32[2]{0}', space=sflag, size = 0x8, scoped, tag = 'scoped memory for tpu_custom_call.1']
    #allocation8 [shape = 's32[2]{0}', space=sflag, size = 0x8, scoped, tag = 'scoped memory for tpu_custom_call.1']
    #allocation9 [shape = 'u8[16384]{0}', space=vmem, size = 0x4000, scoped, tag = 'output window, operand 0']
    %9 = vsyncpa [#allocation7], 0
    %s10 = scalar_lea.sflag [#allocation7], 1
    %11 = vsyncpa %s10, 0
    %12 = vsyncpa [#allocation8], 0
    %s13 = scalar_lea.sflag [#allocation8], 1
    %14 = vsyncpa %s13, 0
    loop: start=0, step=1, limit=18
    $region2: #{tpu_custom_call.1} parent=1 // loop_pre_header
      _
    $region3: #{tpu_custom_call.1} parent=1 // loop_header
      %s16 = sphi 0, %s20
      %p17 = scmp.ge.s32.totalorder %s16, 18
      %s23 = sphi 0, %s42
      %s24 = sphi 0, %s38
      %s25 = sphi 0, %s34
      %s26 = sphi 0, %s23
      %s27 = sphi 0, %s24
      %s28 = sphi 0, %s25
      %s29 = sphi 0, %s26
      %s30 = sphi 0, %s27
      %s31 = sphi 0, %s28
      %s47 = sphi 0, %s49
      %s50 = sphi 0, %s47
      %s51 = sphi 0, %s50
      %s67 = sphi 0, %s51
      %s71 = sphi 0, %s71
      %s73 = sphi 0, %s71
      %s74 = sphi 0, %s73
      %s88 = sphi 0, %s74
      %s92 = sphi 0, %s92
      %s94 = sphi 0, %s92
      %s95 = sphi 0, %s94
      %s109 = sphi 0, %s95
      %s113 = sphi 0, %s113
      %s115 = sphi 0, %s113
      %s116 = sphi 0, %s115
      %s130 = sphi 0, %s116
      %s142 = sphi 0, %s144
      %s145 = sphi 0, %s142
      %s146 = sphi 0, %s145
      %s162 = sphi 0, %s146
    $region4: #{tpu_custom_call.1} parent=1 // loop_header_branch
      %19 = sbr.rel (%p17) target = $region8
    $region5: #{tpu_custom_call.1} parent=1 // loop_body
      %s21 = ssub.s32 %s16, 1
      %s22 = ssub.s32 %s16, 2
      %s32 = sadd.s32 1, %s25
      %p33 = scmp.ge.s32.totalorder %s32, 4
      %s34 = scalar_select %p33, 0, %s32
      %s35 = sadd.s32 1, %s24
      %s36 = scalar_select %p33, %s35, %s24
      %p37 = scmp.ge.s32.totalorder %s36, 2
      %s38 = scalar_select %p37, 0, %s36
      %s39 = sadd.s32 1, %s23
      %s40 = scalar_select %p37, %s39, %s23
      %p41 = scmp.ge.s32.totalorder %s40, 2
      %s42 = scalar_select %p41, 0, %s40
      %s43 = ssub.s32 %s24, %s38
      %s44 = ssub.s32 %s25, %s34
      %s45 = sor.u32 %s43, %s44
      %p46 = scmp.eq.s32.totalorder %s45, 0
      %s48 = sadd.s32 %s47, 1
      %s49 = scalar_select %p46, %s47, %s48
      %p52 = pneg %p46
      %p53 = scmp.eq.s32.totalorder %s16, 15
      %p54 = por %p52, %p53
      %p55 = scmp.ne.s32.totalorder %s47, %s50
      %p56 = scmp.eq.s32.totalorder %s16, 0
      %p57 = por %p55, %p56
      %p58 = scmp.ne.s32.totalorder %s47, %s50
      %p59 = scmp.eq.s32.totalorder %s21, 15
      %p60 = por %p58, %p59
      %p61 = scmp.ne.s32.totalorder %s50, %s51
      %p62 = scmp.eq.s32.totalorder %s21, 0
      %p63 = por %p61, %p62
      %p64 = scmp.ne.s32.totalorder %s50, %s51
      %p65 = scmp.eq.s32.totalorder %s22, 15
      %p66 = por %p64, %p65
      %p68 = scmp.ne.s32.totalorder %s51, %s67
      %p69 = scmp.eq.s32.totalorder %s22, 0
      %p70 = por %p68, %p69
      %s72 = sadd.s32 %s71, 1
      %p75 = scmp.eq.s32.totalorder %s16, 15
      %p76 = scmp.ne.s32.totalorder %s71, %s73
      %p77 = scmp.eq.s32.totalorder %s16, 0
      %p78 = por %p76, %p77
      %p79 = scmp.ne.s32.totalorder %s71, %s73
      %p80 = scmp.eq.s32.totalorder %s21, 15
      %p81 = por %p79, %p80
      %p82 = scmp.ne.s32.totalorder %s73, %s74
      %p83 = scmp.eq.s32.totalorder %s21, 0
      %p84 = por %p82, %p83
      %p85 = scmp.ne.s32.totalorder %s73, %s74
      %p86 = scmp.eq.s32.totalorder %s22, 15
      %p87 = por %p85, %p86
      %p89 = scmp.ne.s32.totalorder %s74, %s88
      %p90 = scmp.eq.s32.totalorder %s22, 0
      %p91 = por %p89, %p90
      %s93 = sadd.s32 %s92, 1
      %p96 = scmp.eq.s32.totalorder %s16, 15
      %p97 = scmp.ne.s32.totalorder %s92, %s94
      %p98 = scmp.eq.s32.totalorder %s16, 0
      %p99 = por %p97, %p98
      %p100 = scmp.ne.s32.totalorder %s92, %s94
      %p101 = scmp.eq.s32.totalorder %s21, 15
      %p102 = por %p100, %p101
      %p103 = scmp.ne.s32.totalorder %s94, %s95
      %p104 = scmp.eq.s32.totalorder %s21, 0
      %p105 = por %p103, %p104
      %p106 = scmp.ne.s32.totalorder %s94, %s95
      %p107 = scmp.eq.s32.totalorder %s22, 15
      %p108 = por %p106, %p107
      %p110 = scmp.ne.s32.totalorder %s95, %s109
      %p111 = scmp.eq.s32.totalorder %s22, 0
      %p112 = por %p110, %p111
      %s114 = sadd.s32 %s113, 1
      %p117 = scmp.eq.s32.totalorder %s16, 15
      %p118 = scmp.ne.s32.totalorder %s113, %s115
      %p119 = scmp.eq.s32.totalorder %s16, 0
      %p120 = por %p118, %p119
      %p121 = scmp.ne.s32.totalorder %s113, %s115
      %p122 = scmp.eq.s32.totalorder %s21, 15
      %p123 = por %p121, %p122
      %p124 = scmp.ne.s32.totalorder %s115, %s116
      %p125 = scmp.eq.s32.totalorder %s21, 0
      %p126 = por %p124, %p125
      %p127 = scmp.ne.s32.totalorder %s115, %s116
      %p128 = scmp.eq.s32.totalorder %s22, 15
      %p129 = por %p127, %p128
      %p131 = scmp.ne.s32.totalorder %s116, %s130
      %p132 = scmp.eq.s32.totalorder %s22, 0
      %p133 = por %p131, %p132
      %s134 = smul.u32 %s24, %s23
      %s135 = smul.u32 %s25, %s23
      %s136 = smul.u32 %s38, %s42
      %s137 = smul.u32 %s34, %s42
      %s138 = ssub.s32 %s134, %s136
      %s139 = ssub.s32 %s135, %s137
      %s140 = sor.u32 %s138, %s139
      %p141 = scmp.eq.s32.totalorder %s140, 0
      %s143 = sadd.s32 %s142, 1
      %s144 = scalar_select %p141, %s142, %s143
      %p147 = pneg %p141
      %p148 = scmp.eq.s32.totalorder %s16, 15
      %p149 = por %p147, %p148
      %p150 = scmp.ne.s32.totalorder %s142, %s145
      %p151 = scmp.eq.s32.totalorder %s16, 0
      %p152 = por %p150, %p151
      %p153 = scmp.ne.s32.totalorder %s142, %s145
      %p154 = scmp.eq.s32.totalorder %s21, 15
      %p155 = por %p153, %p154
      %p156 = scmp.ne.s32.totalorder %s145, %s146
      %p157 = scmp.eq.s32.totalorder %s21, 0
      %p158 = por %p156, %p157
      %p159 = scmp.ne.s32.totalorder %s145, %s146
      %p160 = scmp.eq.s32.totalorder %s22, 15
      %p161 = por %p159, %p160
      %p163 = scmp.ne.s32.totalorder %s146, %s162
      %p164 = scmp.eq.s32.totalorder %s22, 0
      %p165 = por %p163, %p164
      %p166 = scmp.le.s32.totalorder 1, %s16
      %p167 = scmp.lt.s32.totalorder %s16, 17
      %p168 = pnand %p166, %p167
      %p169 = pneg %p168
      // Predicated region
      $region9: #{tpu_custom_call.1} parent=5 // pred_check
        _
      $region10: #{tpu_custom_call.1} parent=5 // pred_check_branch
        %171 = sbr.rel (%p168) target = $region12
      $region11: #{tpu_custom_call.1} parent=5 // pred_region
        %s172 = ssub.s32 %s16, 1
        // Predicated region
        $region13: #{tpu_custom_call.1} parent=11 // pred_check
          %p173 = pneg %p84
        $region14: #{tpu_custom_call.1} parent=11 // pred_check_branch
          %175 = sbr.rel (%p173) target = $region16
        $region15: #{tpu_custom_call.1} parent=11 // pred_region
          _
        $region16: #{tpu_custom_call.1} parent=11 // pred_fallthru
          _
        // Predicated region
        $region17: #{tpu_custom_call.1} parent=11 // pred_check
          %p176 = pneg %p105
        $region18: #{tpu_custom_call.1} parent=11 // pred_check_branch
          %178 = sbr.rel (%p176) target = $region20
        $region19: #{tpu_custom_call.1} parent=11 // pred_region
          _
        $region20: #{tpu_custom_call.1} parent=11 // pred_fallthru
          _
        // Predicated region
        $region21: #{tpu_custom_call.1} parent=11 // pred_check
          %p179 = pneg %p126
        $region22: #{tpu_custom_call.1} parent=11 // pred_check_branch
          %181 = sbr.rel (%p179) target = $region24
        $region23: #{tpu_custom_call.1} parent=11 // pred_region
          _
        $region24: #{tpu_custom_call.1} parent=11 // pred_fallthru
          _
      $region12: #{tpu_custom_call.1} parent=5 // pred_fallthru
        _
      %p182 = scmp.lt.s32.totalorder %s16, 16
      // Predicated region
      $region25: #{tpu_custom_call.1} parent=5 // pred_check
        %p183 = pneg %p182
      $region26: #{tpu_custom_call.1} parent=5 // pred_check_branch
        %185 = sbr.rel (%p183) target = $region28
      $region27: #{tpu_custom_call.1} parent=5 // pred_region
        // Predicated region
        $region29: #{tpu_custom_call.1} parent=27 // pred_check
          %p186 = pneg %p57
        $region30: #{tpu_custom_call.1} parent=27 // pred_check_branch
          %188 = sbr.rel (%p186) target = $region32
        $region31: #{tpu_custom_call.1} parent=27 // pred_region
          %s189 = sand.u32 %s47, 1
          %s190 = scalar_lea.sflag [#allocation7], %s189
          %s191 = sand.u32 %s47, 1
          %s192 = smul.addr %s191, 8
          %s193 = scalar_lea.vmem [#allocation6], %s192
          %s194 = smul.u32 2, %s25
          %s196 = ssub.s32 128, 128
          %197 = vsyncadd %s190, %s196
          %s198 = smul.addr %s24, 8
          %s199 = sadd.s32 %s194, %s198
          %s200 = smul.addr %s199, 64
          %s201 = scalar_lea.hbm %s0, %s200
          %s203 = sshll.u32 %s193, 4
          %s204 = int_to_ptr.vmem [resolvable:$true] %s203
          %206 = dma.hbm_to_vmem [thread:$0]  %s201, 128, %s204, %s190
        $region32: #{tpu_custom_call.1} parent=27 // pred_fallthru
          _
      $region28: #{tpu_custom_call.1} parent=5 // pred_fallthru
        _
      %p207 = scmp.le.s32.totalorder 1, %s16
      %p208 = scmp.lt.s32.totalorder %s16, 17
      %p209 = pnand %p207, %p208
      %p210 = pneg %p209
      // Predicated region
      $region33: #{tpu_custom_call.1} parent=5 // pred_check
        _
      $region34: #{tpu_custom_call.1} parent=5 // pred_check_branch
        %212 = sbr.rel (%p209) target = $region36
      $region35: #{tpu_custom_call.1} parent=5 // pred_region
        %s213 = ssub.s32 %s16, 1
        %s214 = sand.u32 %s50, 1
        %s215 = scalar_lea.sflag [#allocation7], %s214
        %s216 = sand.u32 %s50, 1
        %s217 = smul.addr %s216, 8
        %s218 = scalar_lea.vmem [#allocation6], %s217
        // Predicated region
        $region37: #{tpu_custom_call.1} parent=35 // pred_check
          %p219 = pneg %p63
        $region38: #{tpu_custom_call.1} parent=35 // pred_check_branch
          %221 = sbr.rel (%p219) target = $region40
        $region39: #{tpu_custom_call.1} parent=35 // pred_region
          %222 = dma.done %s215, 128
        $region40: #{tpu_custom_call.1} parent=35 // pred_fallthru
          _
        %s223 = sand.u32 %s50, 1
        %s224 = scalar_lea.sflag [#allocation7], %s223
        %s225 = sand.u32 %s50, 1
        %s226 = smul.addr %s225, 8
        %s227 = scalar_lea.vmem [#allocation6], %s226
        %p228 = pneg %p63
        %p229 = pneg %p60
        %p230 = pneg %p84
        %p231 = pneg %p81
        %p232 = pneg %p105
        %p233 = pneg %p102
        %p234 = pneg %p126
        %p235 = pneg %p123
        %p236 = pneg %p158
        %p237 = pneg %p155
        %s238 = sand.u32 %s145, 1
        %s239 = scalar_lea.sflag [#allocation8], %s238
        %s240 = sand.u32 %s145, 1
        %s241 = smul.addr %s240, 16
        %s242 = scalar_lea.vmem [#allocation9], %s241
        %s243 = smul.u32 2, %s28
        %s244 = smul.u32 %s27, %s26
        %s245 = smul.u32 %s28, %s26
        %s246 = smul.u32 2, %s245
        %p247 = scmp.eq.s32.totalorder %s27, 0
        %p248 = scmp.eq.s32.totalorder %s28, 0
        %p249 = pnand %p247, %p248
        %p250 = pneg %p249
        %p251 = scmp.eq.s32.totalorder %s26, 0
        %p252 = pnand %p251, %p250
        %p253 = pneg %p252
        // Predicated region
        $region41: #{tpu_custom_call.1} parent=35 // pred_check
          _
        $region42: #{tpu_custom_call.1} parent=35 // pred_check_branch
          %255 = sbr.rel (%p252) target = $region44
        $region43: #{tpu_custom_call.1} parent=35 // pred_region
          %vm256 = vcmask 7168
          %257 = vst.msk [vmem:[#allocation2] sm:$0xff] %vm256, 0.0
          %258 = vst.msk [vmem:[#allocation3] sm:$0xff] %vm256, 0.0
        $region44: #{tpu_custom_call.1} parent=35 // pred_fallthru
          _
        // Predicated region
        $region45: #{tpu_custom_call.1} parent=35 // pred_check
          %p259 = pneg %p251
        $region46: #{tpu_custom_call.1} parent=35 // pred_check_branch
          %261 = sbr.rel (%p259) target = $region48
        $region47: #{tpu_custom_call.1} parent=35 // pred_region
          %v262 = vld [vmem:[%s218] sm:$0xff]
          %v263 = vld [vmem:[%s1] sm:$0xff]
          %v265 = vcombine.high %v262, %v262
          %vm266 = vcmask 31744
          %v268 = vsel %vm266, %v263, 0
          %vm270 = vcmask 1043456
          %v271 = vsel %vm270, %v262, 0
          %v273 = vsel %vm270, %v265, 0
          %275 = vmatprep.subr.mxu0 %v273
          %276 = vmatpush1.msra.mxu0 %v271
          %277 = vmatprep.subr.mxu0 0.0
          %278 = vmatpush1.msra.mxu0 0.0
          %279 = vmatprep.subr.mxu0 0.0
          %280 = vmatpush1.msra.mxu0 0.0
          %281 = vmatprep.subr.mxu0 0.0
          %282 = vmatpush1.msra.mxu0 0.0
          %283 = vmatprep.subr.mxu0 0.0
          %284 = vmatpush1.msra.mxu0 0.0
          %285 = vmatprep.subr.mxu0 0.0
          %286 = vmatpush1.msra.mxu0 0.0
          %287 = vmatprep.subr.mxu0 0.0
          %288 = vmatpush1.msra.mxu0 0.0
          %289 = vmatprep.subr.mxu0 0.0
          %290 = vmatpush1.msra.mxu0 0.0
          %291 = vmatprep.subr.mxu0 0.0
          %292 = vmatpush1.msra.mxu0 0.0
          %293 = vmatprep.subr.mxu0 0.0
          %294 = vmatpush1.msra.mxu0 0.0
          %295 = vmatprep.subr.mxu0 0.0
          %296 = vmatpush1.msra.mxu0 0.0
          %297 = vmatprep.subr.mxu0 0.0
          %298 = vmatpush1.msra.mxu0 0.0
          %299 = vmatprep.subr.mxu0 0.0
          %300 = vmatpush1.msra.mxu0 0.0
          %301 = vmatprep.subr.mxu0 0.0
          %302 = vmatpush1.msra.mxu0 0.0
          %303 = vmatprep.subr.mxu0 0.0
          %304 = vmatpush1.msra.mxu0 0.0
          %305 = vmatprep.subr.mxu0 0.0
          %306 = vmatpush1.msra.mxu0 0.0
          %307 = vmatprep.subr.mxu0 0.0
          %308 = vmatpush1.msra.mxu0 0.0
          %309 = vmatprep.subr.mxu0 0.0
          %310 = vmatpush1.msra.mxu0 0.0
          %311 = vmatprep.subr.mxu0 0.0
          %312 = vmatpush1.msra.mxu0 0.0
          %313 = vmatprep.subr.mxu0 0.0
          %314 = vmatpush1.msra.mxu0 0.0
          %315 = vmatprep.subr.mxu0 0.0
          %316 = vmatpush1.msra.mxu0 0.0
          %317 = vmatprep.subr.mxu0 0.0
          %318 = vmatpush1.msra.mxu0 0.0
          %319 = vmatprep.subr.mxu0 0.0
          %320 = vmatpush1.msra.mxu0 0.0
          %321 = vmatprep.subr.mxu0 0.0
          %322 = vmatpush1.msra.mxu0 0.0
          %323 = vmatprep.subr.mxu0 0.0
          %324 = vmatpush1.msra.mxu0 0.0
          %325 = vmatprep.subr.mxu0 0.0
          %326 = vmatpush1.msra.mxu0 0.0
          %327 = vmatprep.subr.mxu0 0.0
          %328 = vmatpush1.msra.mxu0 0.0
          %329 = vmatprep.subr.mxu0 0.0
          %330 = vmatpush1.msra.mxu0 0.0
          %331 = vmatprep.subr.mxu0 0.0
          %332 = vmatpush1.msra.mxu0 0.0
          %333 = vmatprep.subr.mxu0 0.0
          %334 = vmatpush1.msra.mxu0 0.0
          %335 = vmatprep.subr.mxu0 0.0
          %336 = vmatpush1.msra.mxu0 0.0
          %337 = vmatprep.subr.mxu0 0.0
          %338 = vmatpush1.msra.mxu0 0.0
          %339 = vmatprep.mubr.f32.mxu0 0.0
          %340 = vmatmul.mubr.f32.gmra.mrb[0].mxu0 %v268
          %v341 = vpop.f32.mrb[0].mxu0
          %v342 = vadd.f32 0.0, %v341
          %v343 = vpop.f32.mrb[0].mxu0
          %v344 = vadd.f32 0.0, %v343
          %345 = vdwg.mxu0
          %v346 = vld [vmem:[#allocation2] sm:$0xff]
          %v347 = vadd.f32 %v342, %v344
          %348 = vadd.xlane.f32.xlu0 %v347
          %v349 = vpop.xlane.xlu0 %348
          %v350 = vadd.f32 %v346, %v349
          %vm351 = vcmask 7168
          %352 = vst.msk [vmem:[#allocation2] sm:$0xff] %vm351, %v350
          %v353 = vld [vmem:[#allocation3] sm:$0xff]
          %v354 = vmul.f32 %v342, %v342
          %v355 = vmul.f32 %v344, %v344
          %v356 = vadd.f32 %v354, %v355
          %357 = vadd.xlane.f32.xlu0 %v356
          %v358 = vpop.xlane.xlu0 %357
          %v359 = vadd.f32 %v353, %v358
          %360 = vst.msk [vmem:[#allocation3] sm:$0xff] %vm351, %v359
        $region48: #{tpu_custom_call.1} parent=35 // pred_fallthru
          _
        %p361 = scmp.eq.s32.totalorder %s26, 1
        %p362 = pnand %p361, %p250
        %p363 = pneg %p362
        // Predicated region
        $region49: #{tpu_custom_call.1} parent=35 // pred_check
          _
        $region50: #{tpu_custom_call.1} parent=35 // pred_check_branch
          %365 = sbr.rel (%p362) target = $region52
        $region51: #{tpu_custom_call.1} parent=35 // pred_region
          %v366 = vld [vmem:[#allocation2] sm:$0xff]
          %v367 = vmul.f32 %v366, 0.00048828125
          %v368 = vld [vmem:[#allocation3] sm:$0xff]
          %v369 = vmul.f32 %v368, 0.00048828125
          %v370 = vmul.f32 %v367, %v367
          %v371 = vsub.f32 %v369, %v370
          %v372 = vmax.f32 %v371, 0.0
          %v373 = vld [vmem:[%s2] sm:$0xff]
          %v374 = vadd.f32 %v372, 0.001
          %v375 = vrsqrt.pop %v374
          %v376 = vmul.f32 %v373, %v375
          %vm377 = vcmask 7168
          %378 = vst.msk [vmem:[#allocation4] sm:$0xff] %vm377, %v376
          %v379 = vld [vmem:[%s3] sm:$0xff]
          %v380 = vmul.f32 %v367, %v376
          %v381 = vsub.f32 %v379, %v380
          %382 = vst.msk [vmem:[#allocation5] sm:$0xff] %vm377, %v381
        $region52: #{tpu_custom_call.1} parent=35 // pred_fallthru
          _
        // Predicated region
        $region53: #{tpu_custom_call.1} parent=35 // pred_check
          %p383 = pneg %p361
        $region54: #{tpu_custom_call.1} parent=35 // pred_check_branch
          %385 = sbr.rel (%p383) target = $region56
        $region55: #{tpu_custom_call.1} parent=35 // pred_region
          %v386 = vld [vmem:[%s218] sm:$0xff]
          %v387 = vld [vmem:[%s1] sm:$0xff]
          %v389 = vcombine.high %v386, %v386
          %vm390 = vcmask 31744
          %v392 = vsel %vm390, %v387, 0
          %vm394 = vcmask 1043456
          %v395 = vsel %vm394, %v386, 0
          %v397 = vsel %vm394, %v389, 0
          %399 = vmatprep.subr.mxu0 %v397
          %400 = vmatpush1.msra.mxu0 %v395
          %401 = vmatprep.subr.mxu0 0.0
          %402 = vmatpush1.msra.mxu0 0.0
          %403 = vmatprep.subr.mxu0 0.0
          %404 = vmatpush1.msra.mxu0 0.0
          %405 = vmatprep.subr.mxu0 0.0
          %406 = vmatpush1.msra.mxu0 0.0
          %407 = vmatprep.subr.mxu0 0.0
          %408 = vmatpush1.msra.mxu0 0.0
          %409 = vmatprep.subr.mxu0 0.0
          %410 = vmatpush1.msra.mxu0 0.0
          %411 = vmatprep.subr.mxu0 0.0
          %412 = vmatpush1.msra.mxu0 0.0
          %413 = vmatprep.subr.mxu0 0.0
          %414 = vmatpush1.msra.mxu0 0.0
          %415 = vmatprep.subr.mxu0 0.0
          %416 = vmatpush1.msra.mxu0 0.0
          %417 = vmatprep.subr.mxu0 0.0
          %418 = vmatpush1.msra.mxu0 0.0
          %419 = vmatprep.subr.mxu0 0.0
          %420 = vmatpush1.msra.mxu0 0.0
          %421 = vmatprep.subr.mxu0 0.0
          %422 = vmatpush1.msra.mxu0 0.0
          %423 = vmatprep.subr.mxu0 0.0
          %424 = vmatpush1.msra.mxu0 0.0
          %425 = vmatprep.subr.mxu0 0.0
          %426 = vmatpush1.msra.mxu0 0.0
          %427 = vmatprep.subr.mxu0 0.0
          %428 = vmatpush1.msra.mxu0 0.0
          %429 = vmatprep.subr.mxu0 0.0
          %430 = vmatpush1.msra.mxu0 0.0
          %431 = vmatprep.subr.mxu0 0.0
          %432 = vmatpush1.msra.mxu0 0.0
          %433 = vmatprep.subr.mxu0 0.0
          %434 = vmatpush1.msra.mxu0 0.0
          %435 = vmatprep.subr.mxu0 0.0
          %436 = vmatpush1.msra.mxu0 0.0
          %437 = vmatprep.subr.mxu0 0.0
          %438 = vmatpush1.msra.mxu0 0.0
          %439 = vmatprep.subr.mxu0 0.0
          %440 = vmatpush1.msra.mxu0 0.0
          %441 = vmatprep.subr.mxu0 0.0
          %442 = vmatpush1.msra.mxu0 0.0
          %443 = vmatprep.subr.mxu0 0.0
          %444 = vmatpush1.msra.mxu0 0.0
          %445 = vmatprep.subr.mxu0 0.0
          %446 = vmatpush1.msra.mxu0 0.0
          %447 = vmatprep.subr.mxu0 0.0
          %448 = vmatpush1.msra.mxu0 0.0
          %449 = vmatprep.subr.mxu0 0.0
          %450 = vmatpush1.msra.mxu0 0.0
          %451 = vmatprep.subr.mxu0 0.0
          %452 = vmatpush1.msra.mxu0 0.0
          %453 = vmatprep.subr.mxu0 0.0
          %454 = vmatpush1.msra.mxu0 0.0
          %455 = vmatprep.subr.mxu0 0.0
          %456 = vmatpush1.msra.mxu0 0.0
          %457 = vmatprep.subr.mxu0 0.0
          %458 = vmatpush1.msra.mxu0 0.0
          %459 = vmatprep.subr.mxu0 0.0
          %460 = vmatpush1.msra.mxu0 0.0
          %461 = vmatprep.subr.mxu0 0.0
          %462 = vmatpush1.msra.mxu0 0.0
          %463 = vmatprep.mubr.f32.mxu0 0.0
          %464 = vmatmul.mubr.f32.gmra.mrb[0].mxu0 %v392
          %v465 = vpop.f32.mrb[0].mxu0
          %v466 = vadd.f32 0.0, %v465
          %v467 = vpop.f32.mrb[0].mxu0
          %v468 = vadd.f32 0.0, %v467
          %469 = vdwg.mxu0
          %v470 = vld [vmem:[#allocation4] sm:$0xff]
          %472 = vset.pattern.permute.xlu0 0
          %473 = vperm.xlu0 %472, %v470
          %v474 = vpop.permute.xlu0 %473
          %v476 = vmul.f32 %v466, %v474
          %v477 = vmul.f32 %v468, %v474
          %v478 = vld [vmem:[#allocation5] sm:$0xff]
          %480 = vset.pattern.permute.xlu0 0
          %481 = vperm.xlu0 %480, %v478
          %v482 = vpop.permute.xlu0 %481
          %v484 = vadd.f32 %v476, %v482
          %v485 = vadd.f32 %v477, %v482
          %v486 = vmax.f32 %v484, 0.0
          %v487 = vmax.f32 %v485, 0.0
          %488 = vst [vmem:[%s242] sm:$0xff] %v486
          %489 = vst [vmem:[%s242 + $0x8] sm:$0xff] %v487
        $region56: #{tpu_custom_call.1} parent=35 // pred_fallthru
          _
        %s490 = sand.u32 %s145, 1
        %s491 = scalar_lea.sflag [#allocation8], %s490
        %s492 = sand.u32 %s145, 1
        %s493 = smul.addr %s492, 16
        %s494 = scalar_lea.vmem [#allocation9], %s493
        // Predicated region
        $region57: #{tpu_custom_call.1} parent=35 // pred_check
          %p495 = pneg %p155
        $region58: #{tpu_custom_call.1} parent=35 // pred_check_branch
          %497 = sbr.rel (%p495) target = $region60
        $region59: #{tpu_custom_call.1} parent=35 // pred_region
          %s498 = smul.u32 %s27, %s26
          %s499 = smul.u32 %s28, %s26
          %s500 = smul.u32 2, %s499
          %s502 = ssub.s32 256, 256
          %503 = vsyncadd %s491, %s502
          %s504 = smul.addr %s498, 8
          %s505 = sadd.s32 %s500, %s504
          %s506 = smul.addr %s505, 128
          %s507 = scalar_lea.hbm %s4, %s506
          %s509 = sshll.u32 %s494, 4
          %s510 = int_to_ptr.vmem [resolvable:$true] %s509
          %512 = dma.vmem_to_hbm [thread:$0]  %s510, 256, %s507, %s491
        $region60: #{tpu_custom_call.1} parent=35 // pred_fallthru
          _
      $region36: #{tpu_custom_call.1} parent=5 // pred_fallthru
        _
      %p513 = scmp.le.s32.totalorder 2, %s16
      // Predicated region
      $region61: #{tpu_custom_call.1} parent=5 // pred_check
        %p514 = pneg %p513
      $region62: #{tpu_custom_call.1} parent=5 // pred_check_branch
        %516 = sbr.rel (%p514) target = $region64
      $region63: #{tpu_custom_call.1} parent=5 // pred_region
        %s517 = ssub.s32 %s16, 2
        // Predicated region
        $region65: #{tpu_custom_call.1} parent=63 // pred_check
          %p518 = pneg %p161
        $region66: #{tpu_custom_call.1} parent=63 // pred_check_branch
          %520 = sbr.rel (%p518) target = $region68
        $region67: #{tpu_custom_call.1} parent=63 // pred_region
          %s521 = sand.u32 %s146, 1
          %s522 = scalar_lea.sflag [#allocation8], %s521
          %s523 = sand.u32 %s146, 1
          %s524 = smul.addr %s523, 16
          %s525 = scalar_lea.vmem [#allocation9], %s524
          %526 = dma.done %s522, 256
        $region68: #{tpu_custom_call.1} parent=63 // pred_fallthru
          _
      $region64: #{tpu_custom_call.1} parent=5 // pred_fallthru
        _
    $region6: #{tpu_custom_call.1} parent=1 // loop_footer
      %s20 = sadd.s32 1, %s16
    $region7: #{tpu_custom_call.1} parent=1 // loop_footer_branch
      %15 = sbr.rel target = $region3
    $region8: #{tpu_custom_call.1} parent=1 // loop_exit
      _
    %527 = vsyncpa [#allocation7], 1
    %s528 = scalar_lea.sflag [#allocation7], 1
    %529 = vsyncpa %s528, 1
    %530 = vsyncpa [#allocation8], 1
    %s531 = scalar_lea.sflag [#allocation8], 1
    %532 = vsyncpa %s531, 1

</llo_original>
